<compile_context>
chip_gen: v6e
topology: v6e:2x2x1
jax: 0.10.0
libtpu: 0.0.40
codegen_flags: <defaults>
</compile_context>

<pallas_src>
import random

import jax
import jax.numpy as jnp
from jax.experimental import pallas as pl
from jax.experimental.pallas import tpu as pltpu

teacher_forcing_ratio = 0.5


# ---------------------------------------------------------------------------
# Pallas kernels
# ---------------------------------------------------------------------------
def _encoder_kernel(xg_ref, whh_ref, h_ref, c_ref):
    """Fused encoder LSTM recurrence over grid=(S,).

    xg_ref : (1, B, 4H) precomputed x@Wih + b for this time step
    whh_ref: (H, 4H)    recurrent weights (VMEM-resident across the grid)
    h_ref/c_ref: (B, H) outputs with constant block index -> VMEM-resident carries
    """
    s = pl.program_id(0)
    H = h_ref.shape[1]

    @pl.when(s == 0)
    def _():
        h_ref[...] = jnp.zeros_like(h_ref)
        c_ref[...] = jnp.zeros_like(c_ref)

    gates = xg_ref[0] + jnp.dot(h_ref[...], whh_ref[...],
                                preferred_element_type=jnp.float32)  # [B,4H]
    i = jax.nn.sigmoid(gates[:, 0 * H:1 * H])
    f = jax.nn.sigmoid(gates[:, 1 * H:2 * H])
    g = jnp.tanh(gates[:, 2 * H:3 * H])
    o = jax.nn.sigmoid(gates[:, 3 * H:4 * H])
    c_new = f * c_ref[...] + i * g
    h_new = o * jnp.tanh(c_new)
    h_ref[...] = h_new
    c_ref[...] = c_new


def _decoder_kernel(tf_ref,                                   # scalar prefetch (SMEM)
                    x0g_ref, trgxg_ref, h0_ref, c0_ref,       # inputs
                    whh_ref, embwih_ref, wfc_ref, bfc_ref,
                    logits_ref,                               # output
                    h_sc, c_sc, xg_sc):                       # VMEM scratch carries
    """Fused decoder: LSTM cell + fc_out + argmax + teacher forcing per grid step.

    tf_ref    : (T-1,) int32 teacher-forcing flags (SMEM)
    x0g_ref   : (B, 4H)   x@Wih + b of the initial input trg[:, 0]
    trgxg_ref : (1, B, 4H) x@Wih + b of the teacher-forced candidate trg[:, g+1]
    embwih_ref: (Vpad, 4H) dec_emb @ Wih + b (row-padded) for the greedy path
    wfc_ref   : (H, Vpad), bfc_ref: (1, Vpad) (pad bias columns are -1e9)
    logits_ref: (1, B, Vpad) lane-dense per-step output block
    """
    g_idx = pl.program_id(0)
    B, H = h_sc.shape
    Vp = wfc_ref.shape[1]

    @pl.when(g_idx == 0)
    def _():
        h_sc[...] = h0_ref[...]
        c_sc[...] = c0_ref[...]
        xg_sc[...] = x0g_ref[...]

    # LSTM cell (gate order i, f, g, o); x@Wih + b is carried in xg_sc.
    gates = xg_sc[...] + jnp.dot(h_sc[...], whh_ref[...],
                                 preferred_element_type=jnp.float32)  # [B,4H]
    i = jax.nn.sigmoid(gates[:, 0 * H:1 * H])
    f = jax.nn.sigmoid(gates[:, 1 * H:2 * H])
    gg = jnp.tanh(gates[:, 2 * H:3 * H])
    o = jax.nn.sigmoid(gates[:, 3 * H:4 * H])
    c_new = f * c_sc[...] + i * gg
    h_new = o * jnp.tanh(c_new)
    h_sc[...] = h_new
    c_sc[...] = c_new

    # fc_out projection into the lane-dense padded vocab.
    logits = jnp.dot(h_new, wfc_ref[...],
                     preferred_element_type=jnp.float32) + bfc_ref[...]   # [B,Vp]
    logits_ref[0] = logits

    # Greedy argmax (first max index; pad columns are -1e9 so never selected),
    # then next step's gate input: teacher-forced precomputed row vs the
    # predicted token's row of (emb @ Wih + b), selected by the prefetched flag.
    col = jax.lax.broadcasted_iota(jnp.int32, (B, Vp), 1)
    m = jnp.max(logits, axis=1, keepdims=True)
    top1 = jnp.min(jnp.where(logits >= m, col, Vp), axis=1, keepdims=True)  # [B,1]
    onehot = (col == top1).astype(jnp.float32)                              # [B,Vp]
    pred_xg = jnp.dot(onehot, embwih_ref[...],
                      preferred_element_type=jnp.float32)                   # [B,4H]

    tf = (tf_ref[g_idx] != 0).astype(jnp.float32)
    xg_sc[...] = tf * trgxg_ref[0] + (1.0 - tf) * pred_xg


# ---------------------------------------------------------------------------
# Parameter construction (deterministic, synthetic)
# ---------------------------------------------------------------------------
def init_params(key, src_vocab, trg_vocab, emb_dim, hid_dim):
    ks = jax.random.split(key, 10)
    s = 0.1
    return {
        # encoder: Embedding + single-layer LSTM
        "enc_emb": s * jax.random.normal(ks[0], (src_vocab, emb_dim), jnp.float32),
        "enc_wih": s * jax.random.normal(ks[1], (emb_dim, 4 * hid_dim), jnp.float32),
        "enc_whh": s * jax.random.normal(ks[2], (hid_dim, 4 * hid_dim), jnp.float32),
        "enc_b":   s * jax.random.normal(ks[3], (1, 4 * hid_dim), jnp.float32),
        # decoder: Embedding + single-layer LSTM + Linear(hid_dim -> trg_vocab)
        "dec_emb": s * jax.random.normal(ks[4], (trg_vocab, emb_dim), jnp.float32),
        "dec_wih": s * jax.random.normal(ks[5], (emb_dim, 4 * hid_dim), jnp.float32),
        "dec_whh": s * jax.random.normal(ks[6], (hid_dim, 4 * hid_dim), jnp.float32),
        "dec_b":   s * jax.random.normal(ks[7], (1, 4 * hid_dim), jnp.float32),
        "dec_wfc": s * jax.random.normal(ks[8], (hid_dim, trg_vocab), jnp.float32),
        "dec_bfc": s * jax.random.normal(ks[9], (1, trg_vocab), jnp.float32),
    }


# ---------------------------------------------------------------------------
# Seq2Seq forward (mirrors the PyTorch module's forward), fully jitted
# ---------------------------------------------------------------------------
@jax.jit
def seq2seq_forward(params, src, trg, src_len, tf_flags):
    # TODO(synk): pack_padded_sequence masking by src_len is not replicated;
    # the full (padded) source sequence updates h/c. encoder_outputs are unused
    # by this Seq2Seq (no attention), so they are not collected.
    del src_len
    B, S = src.shape
    T = trg.shape[1]
    H = params["enc_whh"].shape[0]
    V = params["dec_wfc"].shape[1]
    V_pad = ((V + 127) // 128) * 128

    # ---- encoder: hoist x@Wih + b out of the recurrence (time-major) ----
    enc_xg = jnp.take(jnp.dot(params["enc_emb"], params["enc_wih"]),
                      src.T, axis=0) + params["enc_b"]             # [S, B, 4H]

    h_enc, c_enc = pl.pallas_call(
        _encoder_kernel,
        out_shape=(jax.ShapeDtypeStruct((B, H), jnp.float32),
                   jax.ShapeDtypeStruct((B, H), jnp.float32)),
        grid=(S,),
        in_specs=[pl.BlockSpec((1, B, 4 * H), lambda s: (s, 0, 0)),
                  pl.BlockSpec((H, 4 * H), lambda s: (0, 0))],
        out_specs=(pl.BlockSpec((B, H), lambda s: (0, 0)),
                   pl.BlockSpec((B, H), lambda s: (0, 0))),
        compiler_params=pltpu.CompilerParams(dimension_semantics=("arbitrary",)),
    )(enc_xg, params["enc_whh"])

    # ---- decoder precompute (non-recurrent terms, bias folded in) ----
    emb_wih_b = jnp.dot(params["dec_emb"], params["dec_wih"]) + params["dec_b"]  # [V,4H]
    trg_all_xg = jnp.take(emb_wih_b, trg.T, axis=0)                # [T, B, 4H]
    x0g = trg_all_xg[0]                                            # [B, 4H]
    trg_next_xg = trg_all_xg[1:]                                   # [T-1, B, 4H]
    emb_wih_pad = jnp.pad(emb_wih_b, ((0, V_pad - V), (0, 0)))     # [Vpad, 4H]
    wfc_pad = jnp.pad(params["dec_wfc"], ((0, 0), (0, V_pad - V)))
    bfc_pad = jnp.pad(params["dec_bfc"], ((0, 0), (0, V_pad - V)),
                      constant_values=-1e9)

    grid_spec = pltpu.PrefetchScalarGridSpec(
        num_scalar_prefetch=1,
        grid=(T - 1,),
        in_specs=[
            pl.BlockSpec((B, 4 * H), lambda g, tf: (0, 0)),         # x0g
            pl.BlockSpec((1, B, 4 * H), lambda g, tf: (g, 0, 0)),   # trg_next_xg
            pl.BlockSpec((B, H), lambda g, tf: (0, 0)),             # h0
            pl.BlockSpec((B, H), lambda g, tf: (0, 0)),             # c0
            pl.BlockSpec((H, 4 * H), lambda g, tf: (0, 0)),         # dec_whh
            pl.BlockSpec((V_pad, 4 * H), lambda g, tf: (0, 0)),     # emb@Wih+b
            pl.BlockSpec((H, V_pad), lambda g, tf: (0, 0)),         # wfc (padded)
            pl.BlockSpec((1, V_pad), lambda g, tf: (0, 0)),         # bfc (padded)
        ],
        out_specs=pl.BlockSpec((1, B, V_pad), lambda g, tf: (g, 0, 0)),
        scratch_shapes=[pltpu.VMEM((B, H), jnp.float32),        # h carry
                        pltpu.VMEM((B, H), jnp.float32),        # c carry
                        pltpu.VMEM((B, 4 * H), jnp.float32)],   # x@Wih+b carry
    )
    logits_slab = pl.pallas_call(
        _decoder_kernel,
        out_shape=jax.ShapeDtypeStruct((T - 1, B, V_pad), jnp.float32),
        grid_spec=grid_spec,
        compiler_params=pltpu.CompilerParams(dimension_semantics=("arbitrary",)),
    )(tf_flags, x0g, trg_next_xg, h_enc, c_enc,
      params["dec_whh"], emb_wih_pad, wfc_pad, bfc_pad)

    # Strip vocab padding; outputs[:, 0, :] stays zero as in the PyTorch module.
    logits = jnp.transpose(logits_slab[:, :, :V], (1, 0, 2))       # [B, T-1, V]
    return jnp.concatenate(
        [jnp.zeros((B, 1, V), jnp.float32), logits], axis=1)       # [B, T, V]


# ---------------------------------------------------------------------------
if __name__ == "__main__":
    B, SRC_LEN, TRG_LEN = 8, 8, 8
    EMB, HID = 16, 32
    SRC_VOCAB, TRG_VOCAB = 20, 24

    key = jax.random.PRNGKey(0)
    k_par, k_src, k_trg = jax.random.split(key, 3)

    params = init_params(k_par, SRC_VOCAB, TRG_VOCAB, EMB, HID)
    src = jax.random.randint(k_src, (B, SRC_LEN), 0, SRC_VOCAB, dtype=jnp.int32)
    trg = jax.random.randint(k_trg, (B, TRG_LEN), 0, TRG_VOCAB, dtype=jnp.int32)
    src_len = jnp.full((B,), SRC_LEN, dtype=jnp.int32)

    # Teacher-forcing decisions precomputed once per call (deterministic),
    # matching the original module's random.random() draws at t = 1..T-1.
    # TODO(synk): PyTorch redraws these per forward call; here they are an input.
    rng = random.Random(0)
    tf_flags = jnp.asarray(
        [1 if rng.random() < teacher_forcing_ratio else 0
         for _ in range(1, TRG_LEN)], dtype=jnp.int32)

    outputs = seq2seq_forward(params, src, trg, src_len, tf_flags)
    outputs = jax.block_until_ready(outputs)

    assert outputs.shape == (B, TRG_LEN, TRG_VOCAB), outputs.shape
    assert outputs.dtype == jnp.float32
    assert bool(jnp.all(jnp.isfinite(outputs)))
    print("KERNEL_OK")
</pallas_src>

<mosaic_0001>
module attributes {stable_mosaic.version = 11 : i64} {
  func.func @_encoder_kernel(%arg0: i32, %arg1: memref<1x8x128xf32, #tpu.memory_space<vmem>>, %arg2: memref<32x128xf32, #tpu.memory_space<vmem>>, %arg3: memref<8x32xf32, #tpu.memory_space<vmem>>, %arg4: memref<8x32xf32, #tpu.memory_space<vmem>>) attributes {dimension_semantics = [#tpu.dimension_semantics<arbitrary>], iteration_bounds = array<i64: 8>, scalar_prefetch = 0 : i64, scratch_operands = 0 : i64, tpu.core_type = #tpu.core_type<tc>, window_params = [{transform_indices = @transform_0, window_bounds = array<i64: 1, 8, 128>}, {pipeline_mode = #tpu.pipeline_mode<synchronous>, transform_indices = @transform_1, window_bounds = array<i64: 32, 128>}, {pipeline_mode = #tpu.pipeline_mode<synchronous>, transform_indices = @transform_2, window_bounds = array<i64: 8, 32>}, {pipeline_mode = #tpu.pipeline_mode<synchronous>, transform_indices = @transform_3, window_bounds = array<i64: 8, 32>}]} {
    %c0_i32 = arith.constant 0 : i32
    %0 = arith.cmpi eq, %arg0, %c0_i32 : i32
    %1 = arith.extui %0 : i1 to i32
    %c0_i32_0 = arith.constant 0 : i32
    %2 = arith.cmpi ne, %1, %c0_i32_0 : i32
    scf.if %2 {
      %cst_16 = arith.constant 0.000000e+00 : f32
      %37 = vector.broadcast %cst_16 : f32 to vector<8x32xf32>
      %c0_17 = arith.constant 0 : index
      %c0_18 = arith.constant 0 : index
      %38 = vector.load %arg3[%c0_17, %c0_18] : memref<8x32xf32, #tpu.memory_space<vmem>>, vector<8x32xf32>
      tpu.vector_store %arg3[%c0_17, %c0_18], %37 {strides = array<i32>} : memref<8x32xf32, #tpu.memory_space<vmem>>, vector<8x32xf32>,
      %cst_19 = arith.constant 0.000000e+00 : f32
      %39 = vector.broadcast %cst_19 : f32 to vector<8x32xf32>
      %c0_20 = arith.constant 0 : index
      %c0_21 = arith.constant 0 : index
      %40 = vector.load %arg4[%c0_20, %c0_21] : memref<8x32xf32, #tpu.memory_space<vmem>>, vector<8x32xf32>
      tpu.vector_store %arg4[%c0_20, %c0_21], %39 {strides = array<i32>} : memref<8x32xf32, #tpu.memory_space<vmem>>, vector<8x32xf32>,
    } else {
    }
    %c0 = arith.constant 0 : index
    %c0_1 = arith.constant 0 : index
    %c0_2 = arith.constant 0 : index
    %3 = vector.load %arg1[%c0, %c0_1, %c0_2] : memref<1x8x128xf32, #tpu.memory_space<vmem>>, vector<1x8x128xf32>
    %4 = vector.shape_cast %3 : vector<1x8x128xf32> to vector<8x128xf32>
    %c0_3 = arith.constant 0 : index
    %c0_4 = arith.constant 0 : index
    %5 = vector.load %arg3[%c0_3, %c0_4] : memref<8x32xf32, #tpu.memory_space<vmem>>, vector<8x32xf32>
    %c0_5 = arith.constant 0 : index
    %c0_6 = arith.constant 0 : index
    %6 = vector.load %arg2[%c0_5, %c0_6] : memref<32x128xf32, #tpu.memory_space<vmem>>, vector<32x128xf32>
    %cst = arith.constant dense<0.000000e+00> : vector<8x128xf32>
    %7 = tpu.matmul %5, %6, %cst {dimension_numbers = #tpu.dot_dimension_numbers<[1], [0], [0], [1], [0, 0, 1, 1], [], []>} : vector<8x32xf32>, vector<32x128xf32>, vector<8x128xf32> -> vector<8x128xf32>
    %8 = arith.addf %4, %7 : vector<8x128xf32>
    %9 = vector.extract_strided_slice %8 {offsets = [0, 0], sizes = [8, 32], strides = [1, 1]} : vector<8x128xf32> to vector<8x32xf32>
    %10 = arith.negf %9 : vector<8x32xf32>
    %11 = math.exp %10 : vector<8x32xf32>
    %cst_7 = arith.constant 1.000000e+00 : f32
    %12 = vector.broadcast %cst_7 : f32 to vector<8x32xf32>
    %13 = arith.addf %12, %11 : vector<8x32xf32>
    %14 = arith.divf %12, %13 : vector<8x32xf32>
    %15 = vector.extract_strided_slice %8 {offsets = [0, 32], sizes = [8, 32], strides = [1, 1]} : vector<8x128xf32> to vector<8x32xf32>
    %16 = arith.negf %15 : vector<8x32xf32>
    %17 = math.exp %16 : vector<8x32xf32>
    %cst_8 = arith.constant 1.000000e+00 : f32
    %18 = vector.broadcast %cst_8 : f32 to vector<8x32xf32>
    %19 = arith.addf %18, %17 : vector<8x32xf32>
    %20 = arith.divf %18, %19 : vector<8x32xf32>
    %21 = vector.extract_strided_slice %8 {offsets = [0, 64], sizes = [8, 32], strides = [1, 1]} : vector<8x128xf32> to vector<8x32xf32>
    %22 = math.tanh %21 : vector<8x32xf32>
    %23 = vector.extract_strided_slice %8 {offsets = [0, 96], sizes = [8, 32], strides = [1, 1]} : vector<8x128xf32> to vector<8x32xf32>
    %24 = arith.negf %23 : vector<8x32xf32>
    %25 = math.exp %24 : vector<8x32xf32>
    %cst_9 = arith.constant 1.000000e+00 : f32
    %26 = vector.broadcast %cst_9 : f32 to vector<8x32xf32>
    %27 = arith.addf %26, %25 : vector<8x32xf32>
    %28 = arith.divf %26, %27 : vector<8x32xf32>
    %c0_10 = arith.constant 0 : index
    %c0_11 = arith.constant 0 : index
    %29 = vector.load %arg4[%c0_10, %c0_11] : memref<8x32xf32, #tpu.memory_space<vmem>>, vector<8x32xf32>
    %30 = arith.mulf %20, %29 : vector<8x32xf32>
    %31 = arith.mulf %14, %22 : vector<8x32xf32>
    %32 = arith.addf %30, %31 : vector<8x32xf32>
    %33 = math.tanh %32 : vector<8x32xf32>
    %34 = arith.mulf %28, %33 : vector<8x32xf32>
    %c0_12 = arith.constant 0 : index
    %c0_13 = arith.constant 0 : index
    %35 = vector.load %arg3[%c0_12, %c0_13] : memref<8x32xf32, #tpu.memory_space<vmem>>, vector<8x32xf32>
    tpu.vector_store %arg3[%c0_12, %c0_13], %34 {strides = array<i32>} : memref<8x32xf32, #tpu.memory_space<vmem>>, vector<8x32xf32>,
    %c0_14 = arith.constant 0 : index
    %c0_15 = arith.constant 0 : index
    %36 = vector.load %arg4[%c0_14, %c0_15] : memref<8x32xf32, #tpu.memory_space<vmem>>, vector<8x32xf32>
    tpu.vector_store %arg4[%c0_14, %c0_15], %32 {strides = array<i32>} : memref<8x32xf32, #tpu.memory_space<vmem>>, vector<8x32xf32>,
    return
  }
  func.func @transform_0(%arg0: i32) -> (i32, i32, i32) {
    %c0_i32 = arith.constant 0 : i32
    %c0_i32_0 = arith.constant 0 : i32
    %c0_i32_1 = arith.constant 0 : i32
    return %arg0, %c0_i32, %c0_i32_0 : i32, i32, i32
  }
  func.func @transform_1(%arg0: i32) -> (i32, i32) {
    %c0_i32 = arith.constant 0 : i32
    %c0_i32_0 = arith.constant 0 : i32
    %c0_i32_1 = arith.constant 0 : i32
    return %c0_i32, %c0_i32_0 : i32, i32
  }
  func.func @transform_2(%arg0: i32) -> (i32, i32) {
    %c0_i32 = arith.constant 0 : i32
    %c0_i32_0 = arith.constant 0 : i32
    %c0_i32_1 = arith.constant 0 : i32
    return %c0_i32, %c0_i32_0 : i32, i32
  }
  func.func @transform_3(%arg0: i32) -> (i32, i32) {
    %c0_i32 = arith.constant 0 : i32
    %c0_i32_0 = arith.constant 0 : i32
    %c0_i32_1 = arith.constant 0 : i32
    return %c0_i32, %c0_i32_0 : i32, i32
  }
}

module attributes {stable_mosaic.version = 11 : i64} {
  func.func @_decoder_kernel(%arg0: i32, %arg1: memref<7xi32, #tpu.memory_space<smem>>, %arg2: memref<8x128xf32, #tpu.memory_space<vmem>>, %arg3: memref<1x8x128xf32, #tpu.memory_space<vmem>>, %arg4: memref<8x32xf32, #tpu.memory_space<vmem>>, %arg5: memref<8x32xf32, #tpu.memory_space<vmem>>, %arg6: memref<32x128xf32, #tpu.memory_space<vmem>>, %arg7: memref<128x128xf32, #tpu.memory_space<vmem>>, %arg8: memref<32x128xf32, #tpu.memory_space<vmem>>, %arg9: memref<1x128xf32, #tpu.memory_space<vmem>>, %arg10: memref<1x8x128xf32, #tpu.memory_space<vmem>>, %arg11: memref<8x32xf32, #tpu.memory_space<vmem>>, %arg12: memref<8x32xf32, #tpu.memory_space<vmem>>, %arg13: memref<8x128xf32, #tpu.memory_space<vmem>>) attributes {dimension_semantics = [#tpu.dimension_semantics<arbitrary>], iteration_bounds = array<i64: 7>, scalar_prefetch = 1 : i64, scratch_operands = 3 : i64, tpu.core_type = #tpu.core_type<tc>, window_params = [{pipeline_mode = #tpu.pipeline_mode<synchronous>, transform_indices = @transform_0, window_bounds = array<i64: 8, 128>}, {transform_indices = @transform_1, window_bounds = array<i64: 1, 8, 128>}, {pipeline_mode = #tpu.pipeline_mode<synchronous>, transform_indices = @transform_2, window_bounds = array<i64: 8, 32>}, {pipeline_mode = #tpu.pipeline_mode<synchronous>, transform_indices = @transform_3, window_bounds = array<i64: 8, 32>}, {pipeline_mode = #tpu.pipeline_mode<synchronous>, transform_indices = @transform_4, window_bounds = array<i64: 32, 128>}, {pipeline_mode = #tpu.pipeline_mode<synchronous>, transform_indices = @transform_5, window_bounds = array<i64: 128, 128>}, {pipeline_mode = #tpu.pipeline_mode<synchronous>, transform_indices = @transform_6, window_bounds = array<i64: 32, 128>}, {pipeline_mode = #tpu.pipeline_mode<synchronous>, transform_indices = @transform_7, window_bounds = array<i64: 1, 128>}, {transform_indices = @transform_8, window_bounds = array<i64: 1, 8, 128>}]} {
    %c0_i32 = arith.constant 0 : i32
    %0 = arith.cmpi eq, %arg0, %c0_i32 : i32
    %1 = arith.extui %0 : i1 to i32
    %c0_i32_0 = arith.constant 0 : i32
    %2 = arith.cmpi ne, %1, %c0_i32_0 : i32
    scf.if %2 {
      %c0_35 = arith.constant 0 : index
      %c0_36 = arith.constant 0 : index
      %73 = vector.load %arg4[%c0_35, %c0_36] : memref<8x32xf32, #tpu.memory_space<vmem>>, vector<8x32xf32>
      %c0_37 = arith.constant 0 : index
      %c0_38 = arith.constant 0 : index
      %74 = vector.load %arg11[%c0_37, %c0_38] : memref<8x32xf32, #tpu.memory_space<vmem>>, vector<8x32xf32>
      tpu.vector_store %arg11[%c0_37, %c0_38], %73 {strides = array<i32>} : memref<8x32xf32, #tpu.memory_space<vmem>>, vector<8x32xf32>,
      %c0_39 = arith.constant 0 : index
      %c0_40 = arith.constant 0 : index
      %75 = vector.load %arg5[%c0_39, %c0_40] : memref<8x32xf32, #tpu.memory_space<vmem>>, vector<8x32xf32>
      %c0_41 = arith.constant 0 : index
      %c0_42 = arith.constant 0 : index
      %76 = vector.load %arg12[%c0_41, %c0_42] : memref<8x32xf32, #tpu.memory_space<vmem>>, vector<8x32xf32>
      tpu.vector_store %arg12[%c0_41, %c0_42], %75 {strides = array<i32>} : memref<8x32xf32, #tpu.memory_space<vmem>>, vector<8x32xf32>,
      %c0_43 = arith.constant 0 : index
      %c0_44 = arith.constant 0 : index
      %77 = vector.load %arg2[%c0_43, %c0_44] : memref<8x128xf32, #tpu.memory_space<vmem>>, vector<8x128xf32>
      %c0_45 = arith.constant 0 : index
      %c0_46 = arith.constant 0 : index
      %78 = vector.load %arg13[%c0_45, %c0_46] : memref<8x128xf32, #tpu.memory_space<vmem>>, vector<8x128xf32>
      tpu.vector_store %arg13[%c0_45, %c0_46], %77 {strides = array<i32>} : memref<8x128xf32, #tpu.memory_space<vmem>>, vector<8x128xf32>,
    } else {
    }
    %c0 = arith.constant 0 : index
    %c0_1 = arith.constant 0 : index
    %3 = vector.load %arg13[%c0, %c0_1] : memref<8x128xf32, #tpu.memory_space<vmem>>, vector<8x128xf32>
    %c0_2 = arith.constant 0 : index
    %c0_3 = arith.constant 0 : index
    %4 = vector.load %arg11[%c0_2, %c0_3] : memref<8x32xf32, #tpu.memory_space<vmem>>, vector<8x32xf32>
    %c0_4 = arith.constant 0 : index
    %c0_5 = arith.constant 0 : index
    %5 = vector.load %arg6[%c0_4, %c0_5] : memref<32x128xf32, #tpu.memory_space<vmem>>, vector<32x128xf32>
    %cst = arith.constant dense<0.000000e+00> : vector<8x128xf32>
    %6 = tpu.matmul %4, %5, %cst {dimension_numbers = #tpu.dot_dimension_numbers<[1], [0], [0], [1], [0, 0, 1, 1], [], []>} : vector<8x32xf32>, vector<32x128xf32>, vector<8x128xf32> -> vector<8x128xf32>
    %7 = arith.addf %3, %6 : vector<8x128xf32>
    %8 = vector.extract_strided_slice %7 {offsets = [0, 0], sizes = [8, 32], strides = [1, 1]} : vector<8x128xf32> to vector<8x32xf32>
    %9 = arith.negf %8 : vector<8x32xf32>
    %10 = math.exp %9 : vector<8x32xf32>
    %cst_6 = arith.constant 1.000000e+00 : f32
    %11 = vector.broadcast %cst_6 : f32 to vector<8x32xf32>
    %12 = arith.addf %11, %10 : vector<8x32xf32>
    %13 = arith.divf %11, %12 : vector<8x32xf32>
    %14 = vector.extract_strided_slice %7 {offsets = [0, 32], sizes = [8, 32], strides = [1, 1]} : vector<8x128xf32> to vector<8x32xf32>
    %15 = arith.negf %14 : vector<8x32xf32>
    %16 = math.exp %15 : vector<8x32xf32>
    %cst_7 = arith.constant 1.000000e+00 : f32
    %17 = vector.broadcast %cst_7 : f32 to vector<8x32xf32>
    %18 = arith.addf %17, %16 : vector<8x32xf32>
    %19 = arith.divf %17, %18 : vector<8x32xf32>
    %20 = vector.extract_strided_slice %7 {offsets = [0, 64], sizes = [8, 32], strides = [1, 1]} : vector<8x128xf32> to vector<8x32xf32>
    %21 = math.tanh %20 : vector<8x32xf32>
    %22 = vector.extract_strided_slice %7 {offsets = [0, 96], sizes = [8, 32], strides = [1, 1]} : vector<8x128xf32> to vector<8x32xf32>
    %23 = arith.negf %22 : vector<8x32xf32>
    %24 = math.exp %23 : vector<8x32xf32>
    %cst_8 = arith.constant 1.000000e+00 : f32
    %25 = vector.broadcast %cst_8 : f32 to vector<8x32xf32>
    %26 = arith.addf %25, %24 : vector<8x32xf32>
    %27 = arith.divf %25, %26 : vector<8x32xf32>
    %c0_9 = arith.constant 0 : index
    %c0_10 = arith.constant 0 : index
    %28 = vector.load %arg12[%c0_9, %c0_10] : memref<8x32xf32, #tpu.memory_space<vmem>>, vector<8x32xf32>
    %29 = arith.mulf %19, %28 : vector<8x32xf32>
    %30 = arith.mulf %13, %21 : vector<8x32xf32>
    %31 = arith.addf %29, %30 : vector<8x32xf32>
    %32 = math.tanh %31 : vector<8x32xf32>
    %33 = arith.mulf %27, %32 : vector<8x32xf32>
    %c0_11 = arith.constant 0 : index
    %c0_12 = arith.constant 0 : index
    %34 = vector.load %arg11[%c0_11, %c0_12] : memref<8x32xf32, #tpu.memory_space<vmem>>, vector<8x32xf32>
    tpu.vector_store %arg11[%c0_11, %c0_12], %33 {strides = array<i32>} : memref<8x32xf32, #tpu.memory_space<vmem>>, vector<8x32xf32>,
    %c0_13 = arith.constant 0 : index
    %c0_14 = arith.constant 0 : index
    %35 = vector.load %arg12[%c0_13, %c0_14] : memref<8x32xf32, #tpu.memory_space<vmem>>, vector<8x32xf32>
    tpu.vector_store %arg12[%c0_13, %c0_14], %31 {strides = array<i32>} : memref<8x32xf32, #tpu.memory_space<vmem>>, vector<8x32xf32>,
    %c0_15 = arith.constant 0 : index
    %c0_16 = arith.constant 0 : index
    %36 = vector.load %arg8[%c0_15, %c0_16] : memref<32x128xf32, #tpu.memory_space<vmem>>, vector<32x128xf32>
    %cst_17 = arith.constant dense<0.000000e+00> : vector<8x128xf32>
    %37 = tpu.matmul %33, %36, %cst_17 {dimension_numbers = #tpu.dot_dimension_numbers<[1], [0], [0], [1], [0, 0, 1, 1], [], []>} : vector<8x32xf32>, vector<32x128xf32>, vector<8x128xf32> -> vector<8x128xf32>
    %c0_18 = arith.constant 0 : index
    %c0_19 = arith.constant 0 : index
    %38 = vector.load %arg9[%c0_18, %c0_19] : memref<1x128xf32, #tpu.memory_space<vmem>>, vector<1x128xf32>
    %39 = vector.broadcast %38 : vector<1x128xf32> to vector<8x128xf32>
    %40 = arith.addf %37, %39 : vector<8x128xf32>
    %c0_20 = arith.constant 0 : index
    %c0_21 = arith.constant 0 : index
    %c0_22 = arith.constant 0 : index
    %41 = vector.load %arg10[%c0_20, %c0_21, %c0_22] : memref<1x8x128xf32, #tpu.memory_space<vmem>>, vector<1x8x128xf32>
    %42 = vector.shape_cast %41 : vector<1x8x128xf32> to vector<8x128xf32>
    %43 = vector.shape_cast %40 : vector<8x128xf32> to vector<1x8x128xf32>
    tpu.vector_store %arg10[%c0_20, %c0_21, %c0_22], %43 {strides = array<i32>} : memref<1x8x128xf32, #tpu.memory_space<vmem>>, vector<1x8x128xf32>,
    %44 = tpu.iota {dimensions = array<i32: 1>} : vector<8x128xi32>
    %cst_23 = arith.constant dense<0xFF800000> : vector<8xf32>
    %45 = vector.multi_reduction <maximumf>, %40, %cst_23 [1] : vector<8x128xf32> to vector<8xf32>
    %46 = vector.shape_cast %45 : vector<8xf32> to vector<8x1xf32>
    %47 = vector.broadcast %46 : vector<8x1xf32> to vector<8x128xf32>
    %48 = arith.cmpf oge, %40, %47 : vector<8x128xf32>
    %c128_i32 = arith.constant 128 : i32
    %49 = vector.broadcast %c128_i32 : i32 to vector<8x128xi32>
    %50 = arith.select %48, %44, %49 : vector<8x128xi1>, vector<8x128xi32>
    %cst_24 = arith.constant dense<2147483647> : vector<8xi32>
    %51 = vector.multi_reduction <minsi>, %50, %cst_24 [1] : vector<8x128xi32> to vector<8xi32>
    %52 = vector.shape_cast %51 : vector<8xi32> to vector<8x1xi32>
    %53 = vector.broadcast %52 : vector<8x1xi32> to vector<8x128xi32>
    %54 = arith.cmpi eq, %44, %53 : vector<8x128xi32>
    %55 = arith.extui %54 : vector<8x128xi1> to vector<8x128xi32>
    %56 = arith.sitofp %55 : vector<8x128xi32> to vector<8x128xf32>
    %c0_25 = arith.constant 0 : index
    %c0_26 = arith.constant 0 : index
    %57 = vector.load %arg7[%c0_25, %c0_26] : memref<128x128xf32, #tpu.memory_space<vmem>>, vector<128x128xf32>
    %cst_27 = arith.constant dense<0.000000e+00> : vector<8x128xf32>
    %58 = tpu.matmul %56, %57, %cst_27 {dimension_numbers = #tpu.dot_dimension_numbers<[1], [0], [0], [1], [0, 0, 1, 1], [], []>} : vector<8x128xf32>, vector<128x128xf32>, vector<8x128xf32> -> vector<8x128xf32>
    %59 = arith.index_cast %arg0 : i32 to index
    %60 = memref.load %arg1[%59] : memref<7xi32, #tpu.memory_space<smem>>
    %c0_i32_28 = arith.constant 0 : i32
    %61 = arith.cmpi ne, %60, %c0_i32_28 : i32
    %62 = arith.extui %61 : i1 to i32
    %63 = arith.sitofp %62 : i32 to f32
    %c0_29 = arith.constant 0 : index
    %c0_30 = arith.constant 0 : index
    %c0_31 = arith.constant 0 : index
    %64 = vector.load %arg3[%c0_29, %c0_30, %c0_31] : memref<1x8x128xf32, #tpu.memory_space<vmem>>, vector<1x8x128xf32>
    %65 = vector.shape_cast %64 : vector<1x8x128xf32> to vector<8x128xf32>
    %66 = vector.broadcast %63 : f32 to vector<8x128xf32>
    %67 = arith.mulf %66, %65 : vector<8x128xf32>
    %cst_32 = arith.constant 1.000000e+00 : f32
    %68 = arith.subf %cst_32, %63 : f32
    %69 = vector.broadcast %68 : f32 to vector<8x128xf32>
    %70 = arith.mulf %69, %58 : vector<8x128xf32>
    %71 = arith.addf %67, %70 : vector<8x128xf32>
    %c0_33 = arith.constant 0 : index
    %c0_34 = arith.constant 0 : index
    %72 = vector.load %arg13[%c0_33, %c0_34] : memref<8x128xf32, #tpu.memory_space<vmem>>, vector<8x128xf32>
    tpu.vector_store %arg13[%c0_33, %c0_34], %71 {strides = array<i32>} : memref<8x128xf32, #tpu.memory_space<vmem>>, vector<8x128xf32>,
    return
  }
  func.func @transform_0(%arg0: i32, %arg1: memref<7xi32, #tpu.memory_space<smem>>) -> (i32, i32) {
    %c0_i32 = arith.constant 0 : i32
    %c0_i32_0 = arith.constant 0 : i32
    %c0_i32_1 = arith.constant 0 : i32
    return %c0_i32, %c0_i32_0 : i32, i32
  }
  func.func @transform_1(%arg0: i32, %arg1: memref<7xi32, #tpu.memory_space<smem>>) -> (i32, i32, i32) {
    %c0_i32 = arith.constant 0 : i32
    %c0_i32_0 = arith.constant 0 : i32
    %c0_i32_1 = arith.constant 0 : i32
    return %arg0, %c0_i32, %c0_i32_0 : i32, i32, i32
  }
  func.func @transform_2(%arg0: i32, %arg1: memref<7xi32, #tpu.memory_space<smem>>) -> (i32, i32) {
    %c0_i32 = arith.constant 0 : i32
    %c0_i32_0 = arith.constant 0 : i32
    %c0_i32_1 = arith.constant 0 : i32
    return %c0_i32, %c0_i32_0 : i32, i32
  }
  func.func @transform_3(%arg0: i32, %arg1: memref<7xi32, #tpu.memory_space<smem>>) -> (i32, i32) {
    %c0_i32 = arith.constant 0 : i32
    %c0_i32_0 = arith.constant 0 : i32
    %c0_i32_1 = arith.constant 0 : i32
    return %c0_i32, %c0_i32_0 : i32, i32
  }
  func.func @transform_4(%arg0: i32, %arg1: memref<7xi32, #tpu.memory_space<smem>>) -> (i32, i32) {
    %c0_i32 = arith.constant 0 : i32
    %c0_i32_0 = arith.constant 0 : i32
    %c0_i32_1 = arith.constant 0 : i32
    return %c0_i32, %c0_i32_0 : i32, i32
  }
  func.func @transform_5(%arg0: i32, %arg1: memref<7xi32, #tpu.memory_space<smem>>) -> (i32, i32) {
    %c0_i32 = arith.constant 0 : i32
    %c0_i32_0 = arith.constant 0 : i32
    %c0_i32_1 = arith.constant 0 : i32
    return %c0_i32, %c0_i32_0 : i32, i32
  }
  func.func @transform_6(%arg0: i32, %arg1: memref<7xi32, #tpu.memory_space<smem>>) -> (i32, i32) {
    %c0_i32 = arith.constant 0 : i32
    %c0_i32_0 = arith.constant 0 : i32
    %c0_i32_1 = arith.constant 0 : i32
    return %c0_i32, %c0_i32_0 : i32, i32
  }
  func.func @transform_7(%arg0: i32, %arg1: memref<7xi32, #tpu.memory_space<smem>>) -> (i32, i32) {
    %c0_i32 = arith.constant 0 : i32
    %c0_i32_0 = arith.constant 0 : i32
    %c0_i32_1 = arith.constant 0 : i32
    return %c0_i32, %c0_i32_0 : i32, i32
  }
  func.func @transform_8(%arg0: i32, %arg1: memref<7xi32, #tpu.memory_space<smem>>) -> (i32, i32, i32) {
    %c0_i32 = arith.constant 0 : i32
    %c0_i32_0 = arith.constant 0 : i32
    %c0_i32_1 = arith.constant 0 : i32
    return %arg0, %c0_i32, %c0_i32_0 : i32, i32, i32
  }
}

</mosaic_0001>

<llo_original>
// kernel: seq2seq_forward.2
$region0: #{seq2seq_forward.2}
  #allocation0 [shape = 'u32[]', space=smem, size = 0x4, offset = 0x4, fixed_abs, tag = 'smem constant byte address 0x4 - core index']
  #allocation1 [shape = 'u32[144,128]{1,0:T(1,128)}', space=vmem, size = 0x12000, scoped, tag = 'internal scratch']
  %s0 = inlined_call_operand.vmem [shape: f32[8,8,128], index: 0, kind: input, shape index: {}]
  %s1 = inlined_call_operand.vmem [shape: f32[32,128], index: 1, kind: input, shape index: {}]
  %s2 = inlined_call_operand.vmem [shape: f32[8,32], index: 2, kind: output, shape index: {0}]
  %s3 = inlined_call_operand.vmem [shape: f32[8,32], index: 3, kind: output, shape index: {1}]
  %4 = xla_tuple %s2, %s3
  %s5 = sld [smem:[#allocation0]]
  $region53: #{seq2seq_forward.2} parent=0
    _
  %s7 = ssub.s32 1, %s5
  %s8 = scalar_select 0, %s7, %s5
  loop: start=0, step=1, limit=10
  $region2: #{seq2seq_forward.2} parent=0 // loop_pre_header
    _
  $region3: #{seq2seq_forward.2} parent=0 // loop_header
    %s10 = sphi 0, %s14
    %p11 = scmp.ge.s32.totalorder %s10, 10
    %s20 = sphi 0, %s22
    %s23 = sphi 0, %s20
    %s24 = sphi 0, %s23
    %s40 = sphi 0, %s24
    %s44 = sphi 0, %s44
    %s46 = sphi 0, %s44
    %s47 = sphi 0, %s46
    %s61 = sphi 0, %s47
    %s65 = sphi 0, %s65
    %s67 = sphi 0, %s65
    %s68 = sphi 0, %s67
    %s82 = sphi 0, %s68
    %s86 = sphi 0, %s86
    %s88 = sphi 0, %s86
    %s89 = sphi 0, %s88
    %s103 = sphi 0, %s89
  $region4: #{seq2seq_forward.2} parent=0 // loop_header_branch
    %13 = sbr.rel (%p11) target = $region8
  $region5: #{seq2seq_forward.2} parent=0 // loop_body
    %s15 = ssub.s32 %s10, 1
    %s16 = ssub.s32 %s10, 2
    %s17 = sadd.s32 %s10, 1
    %s18 = ssub.s32 %s10, %s17
    %p19 = scmp.eq.s32.totalorder %s18, 0
    %s21 = sadd.s32 %s20, 1
    %s22 = scalar_select %p19, %s20, %s21
    %p25 = pneg %p19
    %p26 = scmp.eq.s32.totalorder %s10, 7
    %p27 = por %p25, %p26
    %p28 = scmp.ne.s32.totalorder %s20, %s23
    %p29 = scmp.eq.s32.totalorder %s10, 0
    %p30 = por %p28, %p29
    %p31 = scmp.ne.s32.totalorder %s20, %s23
    %p32 = scmp.eq.s32.totalorder %s15, 7
    %p33 = por %p31, %p32
    %p34 = scmp.ne.s32.totalorder %s23, %s24
    %p35 = scmp.eq.s32.totalorder %s15, 0
    %p36 = por %p34, %p35
    %p37 = scmp.ne.s32.totalorder %s23, %s24
    %p38 = scmp.eq.s32.totalorder %s16, 7
    %p39 = por %p37, %p38
    %p41 = scmp.ne.s32.totalorder %s24, %s40
    %p42 = scmp.eq.s32.totalorder %s16, 0
    %p43 = por %p41, %p42
    %s45 = sadd.s32 %s44, 1
    %p48 = scmp.eq.s32.totalorder %s10, 7
    %p49 = scmp.ne.s32.totalorder %s44, %s46
    %p50 = scmp.eq.s32.totalorder %s10, 0
    %p51 = por %p49, %p50
    %p52 = scmp.ne.s32.totalorder %s44, %s46
    %p53 = scmp.eq.s32.totalorder %s15, 7
    %p54 = por %p52, %p53
    %p55 = scmp.ne.s32.totalorder %s46, %s47
    %p56 = scmp.eq.s32.totalorder %s15, 0
    %p57 = por %p55, %p56
    %p58 = scmp.ne.s32.totalorder %s46, %s47
    %p59 = scmp.eq.s32.totalorder %s16, 7
    %p60 = por %p58, %p59
    %p62 = scmp.ne.s32.totalorder %s47, %s61
    %p63 = scmp.eq.s32.totalorder %s16, 0
    %p64 = por %p62, %p63
    %s66 = sadd.s32 %s65, 1
    %p69 = scmp.eq.s32.totalorder %s10, 7
    %p70 = scmp.ne.s32.totalorder %s65, %s67
    %p71 = scmp.eq.s32.totalorder %s10, 0
    %p72 = por %p70, %p71
    %p73 = scmp.ne.s32.totalorder %s65, %s67
    %p74 = scmp.eq.s32.totalorder %s15, 7
    %p75 = por %p73, %p74
    %p76 = scmp.ne.s32.totalorder %s67, %s68
    %p77 = scmp.eq.s32.totalorder %s15, 0
    %p78 = por %p76, %p77
    %p79 = scmp.ne.s32.totalorder %s67, %s68
    %p80 = scmp.eq.s32.totalorder %s16, 7
    %p81 = por %p79, %p80
    %p83 = scmp.ne.s32.totalorder %s68, %s82
    %p84 = scmp.eq.s32.totalorder %s16, 0
    %p85 = por %p83, %p84
    %s87 = sadd.s32 %s86, 1
    %p90 = scmp.eq.s32.totalorder %s10, 7
    %p91 = scmp.ne.s32.totalorder %s86, %s88
    %p92 = scmp.eq.s32.totalorder %s10, 0
    %p93 = por %p91, %p92
    %p94 = scmp.ne.s32.totalorder %s86, %s88
    %p95 = scmp.eq.s32.totalorder %s15, 7
    %p96 = por %p94, %p95
    %p97 = scmp.ne.s32.totalorder %s88, %s89
    %p98 = scmp.eq.s32.totalorder %s15, 0
    %p99 = por %p97, %p98
    %p100 = scmp.ne.s32.totalorder %s88, %s89
    %p101 = scmp.eq.s32.totalorder %s16, 7
    %p102 = por %p100, %p101
    %p104 = scmp.ne.s32.totalorder %s89, %s103
    %p105 = scmp.eq.s32.totalorder %s16, 0
    %p106 = por %p104, %p105
    %p107 = scmp.le.s32.totalorder 1, %s10
    %p108 = scmp.lt.s32.totalorder %s10, 9
    %p109 = pnand %p107, %p108
    %p110 = pneg %p109
    // Predicated region
    $region9: #{seq2seq_forward.2} parent=5 // pred_check
      _
    $region10: #{seq2seq_forward.2} parent=5 // pred_check_branch
      %112 = sbr.rel (%p109) target = $region12
    $region11: #{seq2seq_forward.2} parent=5 // pred_region
      %s113 = ssub.s32 %s10, 1
      // Predicated region
      $region13: #{seq2seq_forward.2} parent=11 // pred_check
        %p114 = pneg %p57
      $region14: #{seq2seq_forward.2} parent=11 // pred_check_branch
        %116 = sbr.rel (%p114) target = $region16
      $region15: #{seq2seq_forward.2} parent=11 // pred_region
        _
      $region16: #{seq2seq_forward.2} parent=11 // pred_fallthru
        _
    $region12: #{seq2seq_forward.2} parent=5 // pred_fallthru
      _
    %p117 = scmp.lt.s32.totalorder %s10, 8
    // Predicated region
    $region17: #{seq2seq_forward.2} parent=5 // pred_check
      %p118 = pneg %p117
    $region18: #{seq2seq_forward.2} parent=5 // pred_check_branch
      %120 = sbr.rel (%p118) target = $region20
    $region19: #{seq2seq_forward.2} parent=5 // pred_region
      // Predicated region
      $region21: #{seq2seq_forward.2} parent=19 // pred_check
        %p121 = pneg %p30
      $region22: #{seq2seq_forward.2} parent=19 // pred_check_branch
        %123 = sbr.rel (%p121) target = $region24
      $region23: #{seq2seq_forward.2} parent=19 // pred_region
        %p124 = scmp.lt.s32.totalorder %s10, 7
        %s125 = scalar_select %p124, %s10, 7
        %s126 = smul.addr %s125, 8
        %s127 = scalar_lea.vmem %s0, %s126
      $region24: #{seq2seq_forward.2} parent=19 // pred_fallthru
        _
    $region20: #{seq2seq_forward.2} parent=5 // pred_fallthru
      _
    %p128 = scmp.le.s32.totalorder 1, %s10
    %p129 = scmp.lt.s32.totalorder %s10, 9
    %p130 = pnand %p128, %p129
    %p131 = pneg %p130
    // Predicated region
    $region25: #{seq2seq_forward.2} parent=5 // pred_check
      _
    $region26: #{seq2seq_forward.2} parent=5 // pred_check_branch
      %133 = sbr.rel (%p130) target = $region28
    $region27: #{seq2seq_forward.2} parent=5 // pred_region
      %s134 = ssub.s32 %s10, 1
      %p135 = scmp.lt.s32.totalorder %s15, 7
      %s136 = scalar_select %p135, %s15, 7
      %s137 = smul.addr %s136, 8
      %s138 = scalar_lea.vmem %s0, %s137
      %p139 = pneg %p36
      %p140 = pneg %p33
      %p141 = pneg %p57
      %p142 = pneg %p54
      %p143 = pneg %p78
      %p144 = pneg %p75
      %p145 = pneg %p99
      %p146 = pneg %p96
      %p147 = scmp.lt.s32.totalorder %s15, 7
      %s148 = scalar_select %p147, %s15, 7
      %s149 = smul.addr %s148, 8
      %s150 = scalar_lea.vmem %s0, %s149
      %p151 = scmp.eq.s32.totalorder %s15, 0
      // Predicated region
      $region29: #{seq2seq_forward.2} parent=27 // pred_check
        %p152 = pneg %p151
      $region30: #{seq2seq_forward.2} parent=27 // pred_check_branch
        %154 = sbr.rel (%p152) target = $region32
      $region31: #{seq2seq_forward.2} parent=27 // pred_region
        %vm155 = vcmask 261120
        %156 = vst.msk [vmem:[%s2] sm:$0xff] %vm155, 0.0
        %157 = vst.msk [vmem:[%s3] sm:$0xff] %vm155, 0.0
      $region32: #{seq2seq_forward.2} parent=27 // pred_fallthru
        _
      %v158 = vld [vmem:[%s150] sm:$0xff]
      %v159 = vld [vmem:[%s2] sm:$0xff]
      %v160 = vld [vmem:[%s1] sm:$0xff]
      %v161 = vld [vmem:[%s1 + $0x8] sm:$0xff]
      %v162 = vld [vmem:[%s1 + $0x10] sm:$0xff]
      %v163 = vld [vmem:[%s1 + $0x18] sm:$0xff]
      %vm164 = vcmask 261120
      %v166 = vsel %vm164, %v159, 0
      %168 = vmatprep.subr.mxu0 0.0
      %169 = vmatpush1.msra.mxu0 0.0
      %170 = vmatprep.subr.mxu0 0.0
      %171 = vmatpush1.msra.mxu0 0.0
      %172 = vmatprep.subr.mxu0 0.0
      %173 = vmatpush1.msra.mxu0 0.0
      %174 = vmatprep.subr.mxu0 0.0
      %175 = vmatpush1.msra.mxu0 0.0
      %176 = vmatprep.subr.mxu0 0.0
      %177 = vmatpush1.msra.mxu0 0.0
      %178 = vmatprep.subr.mxu0 0.0
      %179 = vmatpush1.msra.mxu0 0.0
      %180 = vmatprep.subr.mxu0 0.0
      %181 = vmatpush1.msra.mxu0 0.0
      %182 = vmatprep.subr.mxu0 0.0
      %183 = vmatpush1.msra.mxu0 0.0
      %184 = vmatprep.subr.mxu0 0.0
      %185 = vmatpush1.msra.mxu0 0.0
      %186 = vmatprep.subr.mxu0 0.0
      %187 = vmatpush1.msra.mxu0 0.0
      %188 = vmatprep.subr.mxu0 0.0
      %189 = vmatpush1.msra.mxu0 0.0
      %190 = vmatprep.subr.mxu0 0.0
      %191 = vmatpush1.msra.mxu0 0.0
      %192 = vmatprep.subr.mxu0 0.0
      %193 = vmatpush1.msra.mxu0 %v163
      %194 = vmatprep.subr.mxu0 0.0
      %195 = vmatpush1.msra.mxu0 %v162
      %196 = vmatprep.subr.mxu0 0.0
      %197 = vmatpush1.msra.mxu0 %v161
      %198 = vmatprep.subr.mxu0 0.0
      %199 = vmatpush1.msra.mxu0 %v160
      %200 = vmatprep.subr.mxu0 0.0
      %201 = vmatpush2.msra.mxu0 0.0
      %202 = vmatprep.subr.mxu0 0.0
      %203 = vmatpush2.msra.mxu0 0.0
      %204 = vmatprep.subr.mxu0 0.0
      %205 = vmatpush2.msra.mxu0 0.0
      %206 = vmatprep.subr.mxu0 0.0
      %207 = vmatpush2.msra.mxu0 0.0
      %208 = vmatprep.subr.mxu0 0.0
      %209 = vmatpush2.msra.mxu0 0.0
      %210 = vmatprep.subr.mxu0 0.0
      %211 = vmatpush2.msra.mxu0 0.0
      %212 = vmatprep.subr.mxu0 0.0
      %213 = vmatpush2.msra.mxu0 0.0
      %214 = vmatprep.subr.mxu0 0.0
      %215 = vmatpush2.msra.mxu0 0.0
      %216 = vmatprep.subr.mxu0 0.0
      %217 = vmatpush2.msra.mxu0 0.0
      %218 = vmatprep.subr.mxu0 0.0
      %219 = vmatpush2.msra.mxu0 0.0
      %220 = vmatprep.subr.mxu0 0.0
      %221 = vmatpush2.msra.mxu0 0.0
      %222 = vmatprep.subr.mxu0 0.0
      %223 = vmatpush2.msra.mxu0 0.0
      %224 = vmatprep.subr.mxu0 0.0
      %225 = vmatpush2.msra.mxu0 0.0
      %226 = vmatprep.subr.mxu0 0.0
      %227 = vmatpush2.msra.mxu0 0.0
      %228 = vmatprep.subr.mxu0 0.0
      %229 = vmatpush2.msra.mxu0 0.0
      %230 = vmatprep.subr.mxu0 0.0
      %231 = vmatpush2.msra.mxu0 0.0
      %232 = vmatprep.mubr.f32.mxu0 0.0
      %233 = vmatmul.mubr.f32.gmra.mxu0 %v166
      %v234 = vpop.f32.mrf.mxu0
      %v235 = vadd.f32 0.0, %v234
      %v236 = vpop.f32.mrf.mxu0
      %237 = vdwg.mxu0
      %v238 = vadd.f32 %v158, %v235
      %v239 = vxor.u32 %v238, 2147483648
      %v240 = vmul.f32 %v239, 1.442695
      %v241 = vpow.pop %v240
      %v242 = vadd.f32 %v241, 1.0
      %v243 = vrcp.pop %v242
      %v244 = vmul.f32 1.0, %v243
      %v245 = vtanh.pop %v238
      %v246 = vld [vmem:[%s3] sm:$0xff]
      %248 = vrot.lane.b32.xlu0 %v246, 32
      %v249 = vpop.permute.xlu0 %248
      %v251 = vmul.f32 %v244, %v249
      %253 = vrot.lane.b32.xlu0 %v245, 64
      %v254 = vpop.permute.xlu0 %253
      %v256 = vmul.f32 %v244, %v254
      %258 = vrot.lane.b32.xlu0 %v256, 32
      %v259 = vpop.permute.xlu0 %258
      %v261 = vadd.f32 %v251, %v259
      %v262 = vtanh.pop %v261
      %264 = vrot.lane.b32.xlu0 %v262, 64
      %v265 = vpop.permute.xlu0 %264
      %v267 = vmul.f32 %v244, %v265
      %269 = vrot.lane.b32.xlu0 %v267, 32
      %v270 = vpop.permute.xlu0 %269
      %272 = vst.msk [vmem:[%s2] sm:$0xff] %vm164, %v270
      %274 = vrot.lane.b32.xlu0 %v261, 96
      %v275 = vpop.permute.xlu0 %274
      %277 = vst.msk [vmem:[%s3] sm:$0xff] %vm164, %v275
      // Predicated region
      $region33: #{seq2seq_forward.2} parent=27 // pred_check
        %p278 = pneg %p75
      $region34: #{seq2seq_forward.2} parent=27 // pred_check_branch
        %280 = sbr.rel (%p278) target = $region36
      $region35: #{seq2seq_forward.2} parent=27 // pred_region
        _
      $region36: #{seq2seq_forward.2} parent=27 // pred_fallthru
        _
      // Predicated region
      $region37: #{seq2seq_forward.2} parent=27 // pred_check
        %p281 = pneg %p96
      $region38: #{seq2seq_forward.2} parent=27 // pred_check_branch
        %283 = sbr.rel (%p281) target = $region40
      $region39: #{seq2seq_forward.2} parent=27 // pred_region
        _
      $region40: #{seq2seq_forward.2} parent=27 // pred_fallthru
        _
      // Predicated region
      $region41: #{seq2seq_forward.2} parent=27 // pred_check
        %p284 = pneg %p75
      $region42: #{seq2seq_forward.2} parent=27 // pred_check_branch
        %286 = sbr.rel (%p284) target = $region44
      $region43: #{seq2seq_forward.2} parent=27 // pred_region
        _
      $region44: #{seq2seq_forward.2} parent=27 // pred_fallthru
        _
      // Predicated region
      $region45: #{seq2seq_forward.2} parent=27 // pred_check
        %p287 = pneg %p96
      $region46: #{seq2seq_forward.2} parent=27 // pred_check_branch
        %289 = sbr.rel (%p287) target = $region48
      $region47: #{seq2seq_forward.2} parent=27 // pred_region
        _
      $region48: #{seq2seq_forward.2} parent=27 // pred_fallthru
        _
    $region28: #{seq2seq_forward.2} parent=5 // pred_fallthru
      _
    %p290 = scmp.le.s32.totalorder 2, %s10
    // Predicated region
    $region49: #{seq2seq_forward.2} parent=5 // pred_check
      %p291 = pneg %p290
    $region50: #{seq2seq_forward.2} parent=5 // pred_check_branch
      %293 = sbr.rel (%p291) target = $region52
    $region51: #{seq2seq_forward.2} parent=5 // pred_region
      %s294 = ssub.s32 %s10, 2
    $region52: #{seq2seq_forward.2} parent=5 // pred_fallthru
      _
  $region6: #{seq2seq_forward.2} parent=0 // loop_footer
    %s14 = sadd.s32 1, %s10
  $region7: #{seq2seq_forward.2} parent=0 // loop_footer_branch
    %9 = sbr.rel target = $region3
  $region8: #{seq2seq_forward.2} parent=0 // loop_exit
    _

// kernel: seq2seq_forward.3
$region0: #{seq2seq_forward.3}
  #allocation0 [shape = 'u32[]', space=smem, size = 0x4, offset = 0x4, fixed_abs, tag = 'smem constant byte address 0x4 - core index']
  #allocation1 [shape = 'u32[144,128]{1,0:T(1,128)}', space=vmem, size = 0x12000, scoped, tag = 'internal scratch']
  #allocation2 [shape = 'f32[8,32]{1,0:T(8,128)}', space=vmem, size = 0x1000, scoped, tag = 'scratch operand']
  #allocation3 [shape = 'f32[8,32]{1,0:T(8,128)}', space=vmem, size = 0x1000, scoped, tag = 'scratch operand']
  #allocation4 [shape = 'f32[8,128]{1,0:T(8,128)}', space=vmem, size = 0x1000, scoped, tag = 'scratch operand']
  #allocation5 [shape = 's32[1]{0}', space=sflag, size = 0x4, scoped, tag = 'scoped memory for seq2seq_forward.3']
  #allocation6 [shape = 'u8[512]{0}', space=smem, size = 0x200, scoped, tag = 'prefetched SMEM operand 0']
  %s0 = inlined_call_operand.vmem [shape: s32[7], index: 0, kind: input, shape index: {}]
  %s1 = inlined_call_operand.vmem [shape: f32[8,128], index: 1, kind: input, shape index: {}]
  %s2 = inlined_call_operand.vmem [shape: f32[7,8,128], index: 2, kind: input, shape index: {}]
  %s3 = inlined_call_operand.vmem [shape: f32[8,32], index: 3, kind: input, shape index: {}]
  %s4 = inlined_call_operand.vmem [shape: f32[8,32], index: 4, kind: input, shape index: {}]
  %s5 = inlined_call_operand.vmem [shape: f32[32,128], index: 5, kind: input, shape index: {}]
  %s6 = inlined_call_operand.vmem [shape: f32[128,128], index: 6, kind: input, shape index: {}]
  %s7 = inlined_call_operand.vmem [shape: f32[32,128], index: 7, kind: input, shape index: {}]
  %s8 = inlined_call_operand.vmem [shape: f32[1,128], index: 8, kind: input, shape index: {}]
  %s9 = inlined_call_operand.vmem [shape: f32[7,8,128], index: 9, kind: output, shape index: {}]
  %s10 = sld [smem:[#allocation0]]
  $region69: #{seq2seq_forward.3} parent=0
    _
  %s12 = ssub.s32 1, %s10
  %s13 = scalar_select 0, %s12, %s10
  %s14 = sshll.u32 %s0, 4
  %s15 = int_to_ptr.vmem [resolvable:$true] %s14
  %17 = dma.vmem_to_smem %s15, 16, [#allocation6], [#allocation5]
  %18 = dma.done [#allocation5], 16
  %19 = sfence
  loop: start=0, step=1, limit=9
  $region2: #{seq2seq_forward.3} parent=0 // loop_pre_header
    _
  $region3: #{seq2seq_forward.3} parent=0 // loop_header
    %s21 = sphi 0, %s25
    %p22 = scmp.ge.s32.totalorder %s21, 9
    %s29 = sphi 0, %s29
    %s31 = sphi 0, %s29
    %s32 = sphi 0, %s31
    %s46 = sphi 0, %s32
    %s52 = sphi 0, %s54
    %s55 = sphi 0, %s52
    %s56 = sphi 0, %s55
    %s72 = sphi 0, %s56
    %s76 = sphi 0, %s76
    %s78 = sphi 0, %s76
    %s79 = sphi 0, %s78
    %s93 = sphi 0, %s79
    %s97 = sphi 0, %s97
    %s99 = sphi 0, %s97
    %s100 = sphi 0, %s99
    %s114 = sphi 0, %s100
    %s118 = sphi 0, %s118
    %s120 = sphi 0, %s118
    %s121 = sphi 0, %s120
    %s135 = sphi 0, %s121
    %s139 = sphi 0, %s139
    %s141 = sphi 0, %s139
    %s142 = sphi 0, %s141
    %s156 = sphi 0, %s142
    %s160 = sphi 0, %s160
    %s162 = sphi 0, %s160
    %s163 = sphi 0, %s162
    %s177 = sphi 0, %s163
    %s181 = sphi 0, %s181
    %s183 = sphi 0, %s181
    %s184 = sphi 0, %s183
    %s198 = sphi 0, %s184
    %s204 = sphi 0, %s206
    %s207 = sphi 0, %s204
    %s208 = sphi 0, %s207
    %s224 = sphi 0, %s208
  $region4: #{seq2seq_forward.3} parent=0 // loop_header_branch
    %24 = sbr.rel (%p22) target = $region8
  $region5: #{seq2seq_forward.3} parent=0 // loop_body
    %s26 = ssub.s32 %s21, 1
    %s27 = ssub.s32 %s21, 2
    %s28 = sadd.s32 %s21, 1
    %s30 = sadd.s32 %s29, 1
    %p33 = scmp.eq.s32.totalorder %s21, 6
    %p34 = scmp.ne.s32.totalorder %s29, %s31
    %p35 = scmp.eq.s32.totalorder %s21, 0
    %p36 = por %p34, %p35
    %p37 = scmp.ne.s32.totalorder %s29, %s31
    %p38 = scmp.eq.s32.totalorder %s26, 6
    %p39 = por %p37, %p38
    %p40 = scmp.ne.s32.totalorder %s31, %s32
    %p41 = scmp.eq.s32.totalorder %s26, 0
    %p42 = por %p40, %p41
    %p43 = scmp.ne.s32.totalorder %s31, %s32
    %p44 = scmp.eq.s32.totalorder %s27, 6
    %p45 = por %p43, %p44
    %p47 = scmp.ne.s32.totalorder %s32, %s46
    %p48 = scmp.eq.s32.totalorder %s27, 0
    %p49 = por %p47, %p48
    %s50 = ssub.s32 %s21, %s28
    %p51 = scmp.eq.s32.totalorder %s50, 0
    %s53 = sadd.s32 %s52, 1
    %s54 = scalar_select %p51, %s52, %s53
    %p57 = pneg %p51
    %p58 = scmp.eq.s32.totalorder %s21, 6
    %p59 = por %p57, %p58
    %p60 = scmp.ne.s32.totalorder %s52, %s55
    %p61 = scmp.eq.s32.totalorder %s21, 0
    %p62 = por %p60, %p61
    %p63 = scmp.ne.s32.totalorder %s52, %s55
    %p64 = scmp.eq.s32.totalorder %s26, 6
    %p65 = por %p63, %p64
    %p66 = scmp.ne.s32.totalorder %s55, %s56
    %p67 = scmp.eq.s32.totalorder %s26, 0
    %p68 = por %p66, %p67
    %p69 = scmp.ne.s32.totalorder %s55, %s56
    %p70 = scmp.eq.s32.totalorder %s27, 6
    %p71 = por %p69, %p70
    %p73 = scmp.ne.s32.totalorder %s56, %s72
    %p74 = scmp.eq.s32.totalorder %s27, 0
    %p75 = por %p73, %p74
    %s77 = sadd.s32 %s76, 1
    %p80 = scmp.eq.s32.totalorder %s21, 6
    %p81 = scmp.ne.s32.totalorder %s76, %s78
    %p82 = scmp.eq.s32.totalorder %s21, 0
    %p83 = por %p81, %p82
    %p84 = scmp.ne.s32.totalorder %s76, %s78
    %p85 = scmp.eq.s32.totalorder %s26, 6
    %p86 = por %p84, %p85
    %p87 = scmp.ne.s32.totalorder %s78, %s79
    %p88 = scmp.eq.s32.totalorder %s26, 0
    %p89 = por %p87, %p88
    %p90 = scmp.ne.s32.totalorder %s78, %s79
    %p91 = scmp.eq.s32.totalorder %s27, 6
    %p92 = por %p90, %p91
    %p94 = scmp.ne.s32.totalorder %s79, %s93
    %p95 = scmp.eq.s32.totalorder %s27, 0
    %p96 = por %p94, %p95
    %s98 = sadd.s32 %s97, 1
    %p101 = scmp.eq.s32.totalorder %s21, 6
    %p102 = scmp.ne.s32.totalorder %s97, %s99
    %p103 = scmp.eq.s32.totalorder %s21, 0
    %p104 = por %p102, %p103
    %p105 = scmp.ne.s32.totalorder %s97, %s99
    %p106 = scmp.eq.s32.totalorder %s26, 6
    %p107 = por %p105, %p106
    %p108 = scmp.ne.s32.totalorder %s99, %s100
    %p109 = scmp.eq.s32.totalorder %s26, 0
    %p110 = por %p108, %p109
    %p111 = scmp.ne.s32.totalorder %s99, %s100
    %p112 = scmp.eq.s32.totalorder %s27, 6
    %p113 = por %p111, %p112
    %p115 = scmp.ne.s32.totalorder %s100, %s114
    %p116 = scmp.eq.s32.totalorder %s27, 0
    %p117 = por %p115, %p116
    %s119 = sadd.s32 %s118, 1
    %p122 = scmp.eq.s32.totalorder %s21, 6
    %p123 = scmp.ne.s32.totalorder %s118, %s120
    %p124 = scmp.eq.s32.totalorder %s21, 0
    %p125 = por %p123, %p124
    %p126 = scmp.ne.s32.totalorder %s118, %s120
    %p127 = scmp.eq.s32.totalorder %s26, 6
    %p128 = por %p126, %p127
    %p129 = scmp.ne.s32.totalorder %s120, %s121
    %p130 = scmp.eq.s32.totalorder %s26, 0
    %p131 = por %p129, %p130
    %p132 = scmp.ne.s32.totalorder %s120, %s121
    %p133 = scmp.eq.s32.totalorder %s27, 6
    %p134 = por %p132, %p133
    %p136 = scmp.ne.s32.totalorder %s121, %s135
    %p137 = scmp.eq.s32.totalorder %s27, 0
    %p138 = por %p136, %p137
    %s140 = sadd.s32 %s139, 1
    %p143 = scmp.eq.s32.totalorder %s21, 6
    %p144 = scmp.ne.s32.totalorder %s139, %s141
    %p145 = scmp.eq.s32.totalorder %s21, 0
    %p146 = por %p144, %p145
    %p147 = scmp.ne.s32.totalorder %s139, %s141
    %p148 = scmp.eq.s32.totalorder %s26, 6
    %p149 = por %p147, %p148
    %p150 = scmp.ne.s32.totalorder %s141, %s142
    %p151 = scmp.eq.s32.totalorder %s26, 0
    %p152 = por %p150, %p151
    %p153 = scmp.ne.s32.totalorder %s141, %s142
    %p154 = scmp.eq.s32.totalorder %s27, 6
    %p155 = por %p153, %p154
    %p157 = scmp.ne.s32.totalorder %s142, %s156
    %p158 = scmp.eq.s32.totalorder %s27, 0
    %p159 = por %p157, %p158
    %s161 = sadd.s32 %s160, 1
    %p164 = scmp.eq.s32.totalorder %s21, 6
    %p165 = scmp.ne.s32.totalorder %s160, %s162
    %p166 = scmp.eq.s32.totalorder %s21, 0
    %p167 = por %p165, %p166
    %p168 = scmp.ne.s32.totalorder %s160, %s162
    %p169 = scmp.eq.s32.totalorder %s26, 6
    %p170 = por %p168, %p169
    %p171 = scmp.ne.s32.totalorder %s162, %s163
    %p172 = scmp.eq.s32.totalorder %s26, 0
    %p173 = por %p171, %p172
    %p174 = scmp.ne.s32.totalorder %s162, %s163
    %p175 = scmp.eq.s32.totalorder %s27, 6
    %p176 = por %p174, %p175
    %p178 = scmp.ne.s32.totalorder %s163, %s177
    %p179 = scmp.eq.s32.totalorder %s27, 0
    %p180 = por %p178, %p179
    %s182 = sadd.s32 %s181, 1
    %p185 = scmp.eq.s32.totalorder %s21, 6
    %p186 = scmp.ne.s32.totalorder %s181, %s183
    %p187 = scmp.eq.s32.totalorder %s21, 0
    %p188 = por %p186, %p187
    %p189 = scmp.ne.s32.totalorder %s181, %s183
    %p190 = scmp.eq.s32.totalorder %s26, 6
    %p191 = por %p189, %p190
    %p192 = scmp.ne.s32.totalorder %s183, %s184
    %p193 = scmp.eq.s32.totalorder %s26, 0
    %p194 = por %p192, %p193
    %p195 = scmp.ne.s32.totalorder %s183, %s184
    %p196 = scmp.eq.s32.totalorder %s27, 6
    %p197 = por %p195, %p196
    %p199 = scmp.ne.s32.totalorder %s184, %s198
    %p200 = scmp.eq.s32.totalorder %s27, 0
    %p201 = por %p199, %p200
    %s202 = ssub.s32 %s21, %s28
    %p203 = scmp.eq.s32.totalorder %s202, 0
    %s205 = sadd.s32 %s204, 1
    %s206 = scalar_select %p203, %s204, %s205
    %p209 = pneg %p203
    %p210 = scmp.eq.s32.totalorder %s21, 6
    %p211 = por %p209, %p210
    %p212 = scmp.ne.s32.totalorder %s204, %s207
    %p213 = scmp.eq.s32.totalorder %s21, 0
    %p214 = por %p212, %p213
    %p215 = scmp.ne.s32.totalorder %s204, %s207
    %p216 = scmp.eq.s32.totalorder %s26, 6
    %p217 = por %p215, %p216
    %p218 = scmp.ne.s32.totalorder %s207, %s208
    %p219 = scmp.eq.s32.totalorder %s26, 0
    %p220 = por %p218, %p219
    %p221 = scmp.ne.s32.totalorder %s207, %s208
    %p222 = scmp.eq.s32.totalorder %s27, 6
    %p223 = por %p221, %p222
    %p225 = scmp.ne.s32.totalorder %s208, %s224
    %p226 = scmp.eq.s32.totalorder %s27, 0
    %p227 = por %p225, %p226
    %p228 = scmp.le.s32.totalorder 1, %s21
    %p229 = scmp.lt.s32.totalorder %s21, 8
    %p230 = pnand %p228, %p229
    %p231 = pneg %p230
    // Predicated region
    $region9: #{seq2seq_forward.3} parent=5 // pred_check
      _
    $region10: #{seq2seq_forward.3} parent=5 // pred_check_branch
      %233 = sbr.rel (%p230) target = $region12
    $region11: #{seq2seq_forward.3} parent=5 // pred_region
      %s234 = ssub.s32 %s21, 1
      // Predicated region
      $region13: #{seq2seq_forward.3} parent=11 // pred_check
        %p235 = pneg %p42
      $region14: #{seq2seq_forward.3} parent=11 // pred_check_branch
        %237 = sbr.rel (%p235) target = $region16
      $region15: #{seq2seq_forward.3} parent=11 // pred_region
        _
      $region16: #{seq2seq_forward.3} parent=11 // pred_fallthru
        _
      // Predicated region
      $region17: #{seq2seq_forward.3} parent=11 // pred_check
        %p238 = pneg %p89
      $region18: #{seq2seq_forward.3} parent=11 // pred_check_branch
        %240 = sbr.rel (%p238) target = $region20
      $region19: #{seq2seq_forward.3} parent=11 // pred_region
        _
      $region20: #{seq2seq_forward.3} parent=11 // pred_fallthru
        _
      // Predicated region
      $region21: #{seq2seq_forward.3} parent=11 // pred_check
        %p241 = pneg %p110
      $region22: #{seq2seq_forward.3} parent=11 // pred_check_branch
        %243 = sbr.rel (%p241) target = $region24
      $region23: #{seq2seq_forward.3} parent=11 // pred_region
        _
      $region24: #{seq2seq_forward.3} parent=11 // pred_fallthru
        _
      // Predicated region
      $region25: #{seq2seq_forward.3} parent=11 // pred_check
        %p244 = pneg %p131
      $region26: #{seq2seq_forward.3} parent=11 // pred_check_branch
        %246 = sbr.rel (%p244) target = $region28
      $region27: #{seq2seq_forward.3} parent=11 // pred_region
        _
      $region28: #{seq2seq_forward.3} parent=11 // pred_fallthru
        _
      // Predicated region
      $region29: #{seq2seq_forward.3} parent=11 // pred_check
        %p247 = pneg %p152
      $region30: #{seq2seq_forward.3} parent=11 // pred_check_branch
        %249 = sbr.rel (%p247) target = $region32
      $region31: #{seq2seq_forward.3} parent=11 // pred_region
        _
      $region32: #{seq2seq_forward.3} parent=11 // pred_fallthru
        _
      // Predicated region
      $region33: #{seq2seq_forward.3} parent=11 // pred_check
        %p250 = pneg %p173
      $region34: #{seq2seq_forward.3} parent=11 // pred_check_branch
        %252 = sbr.rel (%p250) target = $region36
      $region35: #{seq2seq_forward.3} parent=11 // pred_region
        _
      $region36: #{seq2seq_forward.3} parent=11 // pred_fallthru
        _
      // Predicated region
      $region37: #{seq2seq_forward.3} parent=11 // pred_check
        %p253 = pneg %p194
      $region38: #{seq2seq_forward.3} parent=11 // pred_check_branch
        %255 = sbr.rel (%p253) target = $region40
      $region39: #{seq2seq_forward.3} parent=11 // pred_region
        _
      $region40: #{seq2seq_forward.3} parent=11 // pred_fallthru
        _
    $region12: #{seq2seq_forward.3} parent=5 // pred_fallthru
      _
    %p256 = scmp.lt.s32.totalorder %s21, 7
    // Predicated region
    $region41: #{seq2seq_forward.3} parent=5 // pred_check
      %p257 = pneg %p256
    $region42: #{seq2seq_forward.3} parent=5 // pred_check_branch
      %259 = sbr.rel (%p257) target = $region44
    $region43: #{seq2seq_forward.3} parent=5 // pred_region
      // Predicated region
      $region45: #{seq2seq_forward.3} parent=43 // pred_check
        %p260 = pneg %p62
      $region46: #{seq2seq_forward.3} parent=43 // pred_check_branch
        %262 = sbr.rel (%p260) target = $region48
      $region47: #{seq2seq_forward.3} parent=43 // pred_region
        %p263 = scmp.lt.s32.totalorder %s21, 6
        %s264 = scalar_select %p263, %s21, 6
        %s265 = smul.addr %s264, 8
        %s266 = scalar_lea.vmem %s2, %s265
      $region48: #{seq2seq_forward.3} parent=43 // pred_fallthru
        _
    $region44: #{seq2seq_forward.3} parent=5 // pred_fallthru
      _
    %p267 = scmp.le.s32.totalorder 1, %s21
    %p268 = scmp.lt.s32.totalorder %s21, 8
    %p269 = pnand %p267, %p268
    %p270 = pneg %p269
    // Predicated region
    $region49: #{seq2seq_forward.3} parent=5 // pred_check
      _
    $region50: #{seq2seq_forward.3} parent=5 // pred_check_branch
      %272 = sbr.rel (%p269) target = $region52
    $region51: #{seq2seq_forward.3} parent=5 // pred_region
      %s273 = ssub.s32 %s21, 1
      %p274 = pneg %p42
      %p275 = pneg %p39
      %p276 = scmp.lt.s32.totalorder %s26, 6
      %s277 = scalar_select %p276, %s26, 6
      %s278 = smul.addr %s277, 8
      %s279 = scalar_lea.vmem %s2, %s278
      %p280 = pneg %p68
      %p281 = pneg %p65
      %p282 = pneg %p89
      %p283 = pneg %p86
      %p284 = pneg %p110
      %p285 = pneg %p107
      %p286 = pneg %p131
      %p287 = pneg %p128
      %p288 = pneg %p152
      %p289 = pneg %p149
      %p290 = pneg %p173
      %p291 = pneg %p170
      %p292 = pneg %p194
      %p293 = pneg %p191
      %p294 = pneg %p220
      %p295 = pneg %p217
      %p296 = scmp.lt.s32.totalorder %s26, 6
      %s297 = scalar_select %p296, %s26, 6
      %s298 = smul.addr %s297, 8
      %s299 = scalar_lea.vmem %s9, %s298
      %p300 = scmp.lt.s32.totalorder %s26, 6
      %s301 = scalar_select %p300, %s26, 6
      %s302 = smul.addr %s301, 8
      %s303 = scalar_lea.vmem %s2, %s302
      %p304 = scmp.lt.s32.totalorder %s26, 6
      %s305 = scalar_select %p304, %s26, 6
      %s306 = smul.addr %s305, 8
      %s307 = scalar_lea.vmem %s9, %s306
      %p308 = scmp.eq.s32.totalorder %s26, 0
      // Predicated region
      $region53: #{seq2seq_forward.3} parent=51 // pred_check
        %p309 = pneg %p308
      $region54: #{seq2seq_forward.3} parent=51 // pred_check_branch
        %311 = sbr.rel (%p309) target = $region56
      $region55: #{seq2seq_forward.3} parent=51 // pred_region
        %v312 = vld [vmem:[%s3] sm:$0xff]
        %vm313 = vcmask 261120
        %314 = vst.msk [vmem:[#allocation2] sm:$0xff] %vm313, %v312
        %v315 = vld [vmem:[%s4] sm:$0xff]
        %316 = vst.msk [vmem:[#allocation3] sm:$0xff] %vm313, %v315
        %v317 = vld [vmem:[%s1] sm:$0xff]
        %318 = vst [vmem:[#allocation4] sm:$0xff] %v317
      $region56: #{seq2seq_forward.3} parent=51 // pred_fallthru
        _
      %v319 = vld [vmem:[#allocation4] sm:$0xff]
      %v320 = vld [vmem:[#allocation2] sm:$0xff]
      %v321 = vld [vmem:[%s5] sm:$0xff]
      %v322 = vld [vmem:[%s5 + $0x8] sm:$0xff]
      %v323 = vld [vmem:[%s5 + $0x10] sm:$0xff]
      %v324 = vld [vmem:[%s5 + $0x18] sm:$0xff]
      %vm325 = vcmask 261120
      %v327 = vsel %vm325, %v320, 0
      %329 = vmatprep.subr.mxu0 0.0
      %330 = vmatpush1.msra.mxu0 0.0
      %331 = vmatprep.subr.mxu0 0.0
      %332 = vmatpush1.msra.mxu0 0.0
      %333 = vmatprep.subr.mxu0 0.0
      %334 = vmatpush1.msra.mxu0 0.0
      %335 = vmatprep.subr.mxu0 0.0
      %336 = vmatpush1.msra.mxu0 0.0
      %337 = vmatprep.subr.mxu0 0.0
      %338 = vmatpush1.msra.mxu0 0.0
      %339 = vmatprep.subr.mxu0 0.0
      %340 = vmatpush1.msra.mxu0 0.0
      %341 = vmatprep.subr.mxu0 0.0
      %342 = vmatpush1.msra.mxu0 0.0
      %343 = vmatprep.subr.mxu0 0.0
      %344 = vmatpush1.msra.mxu0 0.0
      %345 = vmatprep.subr.mxu0 0.0
      %346 = vmatpush1.msra.mxu0 0.0
      %347 = vmatprep.subr.mxu0 0.0
      %348 = vmatpush1.msra.mxu0 0.0
      %349 = vmatprep.subr.mxu0 0.0
      %350 = vmatpush1.msra.mxu0 0.0
      %351 = vmatprep.subr.mxu0 0.0
      %352 = vmatpush1.msra.mxu0 0.0
      %353 = vmatprep.subr.mxu0 0.0
      %354 = vmatpush1.msra.mxu0 %v324
      %355 = vmatprep.subr.mxu0 0.0
      %356 = vmatpush1.msra.mxu0 %v323
      %357 = vmatprep.subr.mxu0 0.0
      %358 = vmatpush1.msra.mxu0 %v322
      %359 = vmatprep.subr.mxu0 0.0
      %360 = vmatpush1.msra.mxu0 %v321
      %361 = vmatprep.subr.mxu0 0.0
      %362 = vmatpush2.msra.mxu0 0.0
      %363 = vmatprep.subr.mxu0 0.0
      %364 = vmatpush2.msra.mxu0 0.0
      %365 = vmatprep.subr.mxu0 0.0
      %366 = vmatpush2.msra.mxu0 0.0
      %367 = vmatprep.subr.mxu0 0.0
      %368 = vmatpush2.msra.mxu0 0.0
      %369 = vmatprep.subr.mxu0 0.0
      %370 = vmatpush2.msra.mxu0 0.0
      %371 = vmatprep.subr.mxu0 0.0
      %372 = vmatpush2.msra.mxu0 0.0
      %373 = vmatprep.subr.mxu0 0.0
      %374 = vmatpush2.msra.mxu0 0.0
      %375 = vmatprep.subr.mxu0 0.0
      %376 = vmatpush2.msra.mxu0 0.0
      %377 = vmatprep.subr.mxu0 0.0
      %378 = vmatpush2.msra.mxu0 0.0
      %379 = vmatprep.subr.mxu0 0.0
      %380 = vmatpush2.msra.mxu0 0.0
      %381 = vmatprep.subr.mxu0 0.0
      %382 = vmatpush2.msra.mxu0 0.0
      %383 = vmatprep.subr.mxu0 0.0
      %384 = vmatpush2.msra.mxu0 0.0
      %385 = vmatprep.subr.mxu0 0.0
      %386 = vmatpush2.msra.mxu0 0.0
      %387 = vmatprep.subr.mxu0 0.0
      %388 = vmatpush2.msra.mxu0 0.0
      %389 = vmatprep.subr.mxu0 0.0
      %390 = vmatpush2.msra.mxu0 0.0
      %391 = vmatprep.subr.mxu0 0.0
      %392 = vmatpush2.msra.mxu0 0.0
      %393 = vmatprep.mubr.f32.mxu0 0.0
      %394 = vmatmul.mubr.f32.gmra.mxu0 %v327
      %v395 = vpop.f32.mrf.mxu0
      %v396 = vadd.f32 0.0, %v395
      %v397 = vpop.f32.mrf.mxu0
      %398 = vdwg.mxu0
      %v399 = vadd.f32 %v319, %v396
      %v400 = vxor.u32 %v399, 2147483648
      %v401 = vmul.f32 %v400, 1.442695
      %v402 = vpow.pop %v401
      %v403 = vadd.f32 %v402, 1.0
      %v404 = vrcp.pop %v403
      %v405 = vmul.f32 1.0, %v404
      %v406 = vtanh.pop %v399
      %v407 = vld [vmem:[#allocation3] sm:$0xff]
      %409 = vrot.lane.b32.xlu0 %v407, 32
      %v410 = vpop.permute.xlu0 %409
      %v412 = vmul.f32 %v405, %v410
      %414 = vrot.lane.b32.xlu0 %v406, 64
      %v415 = vpop.permute.xlu0 %414
      %v417 = vmul.f32 %v405, %v415
      %419 = vrot.lane.b32.xlu0 %v417, 32
      %v420 = vpop.permute.xlu0 %419
      %v422 = vadd.f32 %v412, %v420
      %v423 = vtanh.pop %v422
      %425 = vrot.lane.b32.xlu0 %v423, 64
      %v426 = vpop.permute.xlu0 %425
      %v428 = vmul.f32 %v405, %v426
      %430 = vrot.lane.b32.xlu0 %v428, 32
      %v431 = vpop.permute.xlu0 %430
      %433 = vst.msk [vmem:[#allocation2] sm:$0xff] %vm325, %v431
      %435 = vrot.lane.b32.xlu0 %v422, 96
      %v436 = vpop.permute.xlu0 %435
      %438 = vst.msk [vmem:[#allocation3] sm:$0xff] %vm325, %v436
      %v439 = vld [vmem:[%s7] sm:$0xff]
      %v440 = vld [vmem:[%s7 + $0x8] sm:$0xff]
      %v441 = vld [vmem:[%s7 + $0x10] sm:$0xff]
      %v442 = vld [vmem:[%s7 + $0x18] sm:$0xff]
      %v443 = vld [vmem:[%s8] sm:$0x1]
      %v445 = vlaneseq
      %v446 = vshrl.u32 %v445, 7
      %v447 = vsub.s32 0, %v446
      %v448 = vrot.slane %v443, %v447
      %v450 = vsel %vm325, %v431, 0
      %452 = vmatprep.subr.mxu0 0.0
      %453 = vmatpush1.msra.mxu0 0.0
      %454 = vmatprep.subr.mxu0 0.0
      %455 = vmatpush1.msra.mxu0 0.0
      %456 = vmatprep.subr.mxu0 0.0
      %457 = vmatpush1.msra.mxu0 0.0
      %458 = vmatprep.subr.mxu0 0.0
      %459 = vmatpush1.msra.mxu0 0.0
      %460 = vmatprep.subr.mxu0 0.0
      %461 = vmatpush1.msra.mxu0 0.0
      %462 = vmatprep.subr.mxu0 0.0
      %463 = vmatpush1.msra.mxu0 0.0
      %464 = vmatprep.subr.mxu0 0.0
      %465 = vmatpush1.msra.mxu0 0.0
      %466 = vmatprep.subr.mxu0 0.0
      %467 = vmatpush1.msra.mxu0 0.0
      %468 = vmatprep.subr.mxu0 0.0
      %469 = vmatpush1.msra.mxu0 0.0
      %470 = vmatprep.subr.mxu0 0.0
      %471 = vmatpush1.msra.mxu0 0.0
      %472 = vmatprep.subr.mxu0 0.0
      %473 = vmatpush1.msra.mxu0 0.0
      %474 = vmatprep.subr.mxu0 0.0
      %475 = vmatpush1.msra.mxu0 0.0
      %476 = vmatprep.subr.mxu0 0.0
      %477 = vmatpush1.msra.mxu0 %v442
      %478 = vmatprep.subr.mxu0 0.0
      %479 = vmatpush1.msra.mxu0 %v441
      %480 = vmatprep.subr.mxu0 0.0
      %481 = vmatpush1.msra.mxu0 %v440
      %482 = vmatprep.subr.mxu0 0.0
      %483 = vmatpush1.msra.mxu0 %v439
      %484 = vmatprep.subr.mxu0 0.0
      %485 = vmatpush2.msra.mxu0 0.0
      %486 = vmatprep.subr.mxu0 0.0
      %487 = vmatpush2.msra.mxu0 0.0
      %488 = vmatprep.subr.mxu0 0.0
      %489 = vmatpush2.msra.mxu0 0.0
      %490 = vmatprep.subr.mxu0 0.0
      %491 = vmatpush2.msra.mxu0 0.0
      %492 = vmatprep.subr.mxu0 0.0
      %493 = vmatpush2.msra.mxu0 0.0
      %494 = vmatprep.subr.mxu0 0.0
      %495 = vmatpush2.msra.mxu0 0.0
      %496 = vmatprep.subr.mxu0 0.0
      %497 = vmatpush2.msra.mxu0 0.0
      %498 = vmatprep.subr.mxu0 0.0
      %499 = vmatpush2.msra.mxu0 0.0
      %500 = vmatprep.subr.mxu0 0.0
      %501 = vmatpush2.msra.mxu0 0.0
      %502 = vmatprep.subr.mxu0 0.0
      %503 = vmatpush2.msra.mxu0 0.0
      %504 = vmatprep.subr.mxu0 0.0
      %505 = vmatpush2.msra.mxu0 0.0
      %506 = vmatprep.subr.mxu0 0.0
      %507 = vmatpush2.msra.mxu0 0.0
      %508 = vmatprep.subr.mxu0 0.0
      %509 = vmatpush2.msra.mxu0 0.0
      %510 = vmatprep.subr.mxu0 0.0
      %511 = vmatpush2.msra.mxu0 0.0
      %512 = vmatprep.subr.mxu0 0.0
      %513 = vmatpush2.msra.mxu0 0.0
      %514 = vmatprep.subr.mxu0 0.0
      %515 = vmatpush2.msra.mxu0 0.0
      %516 = vmatprep.mubr.f32.mxu0 0.0
      %517 = vmatmul.mubr.f32.gmra.mxu0 %v450
      %v518 = vpop.f32.mrf.mxu0
      %v519 = vadd.f32 %v448, %v518
      %v520 = vpop.f32.mrf.mxu0
      %521 = vdwg.mxu0
      %522 = vst [vmem:[%s307] sm:$0xff] %v519
      %v523 = vlaneseq
      %v524 = vand.u32 %v523, 127
      %525 = vmax.xlane.f32.xlu0 %v519
      %v526 = vpop.xlane.xlu0 %525
      %vm527 = vcmp.ge.f32.partialorder %v519, %v526
      %v528 = vsel %vm527, %v524, 128
      %v529 = vand.u32 %v528, 65535
      %v530 = vshra.s32 %v528, 16
      %v531 = vcvt.s32.f32 %v529
      %v532 = vcvt.s32.f32 %v530
      %533 = vmin.xlane.f32.xlu0 %v532
      %v534 = vpop.xlane.xlu0 %533
      %vm535 = vcmp.eq.f32.partialorder %v532, %v534
      %v536 = vsel %vm535, %v531, inf
      %537 = vmin.xlane.f32.xlu0 %v536
      %v538 = vpop.xlane.xlu0 %537
      %v539 = vcvt.f32.s32 %v538
      %v540 = vcvt.f32.s32 %v534
      %v541 = vshll.u32 %v540, 16
      %v542 = vadd.s32 %v541, %v539
      %vm543 = vcmp.eq.s32.totalorder %v524, %v542
      %v544 = vsel %vm543, 1, 0
      %v545 = vcvt.s32.f32 %v544
      %v546 = vld [vmem:[%s6] sm:$0xff]
      %v547 = vld [vmem:[%s6 + $0x8] sm:$0xff]
      %v548 = vld [vmem:[%s6 + $0x10] sm:$0xff]
      %v549 = vld [vmem:[%s6 + $0x18] sm:$0xff]
      %v550 = vld [vmem:[%s6 + $0x20] sm:$0xff]
      %v551 = vld [vmem:[%s6 + $0x28] sm:$0xff]
      %v552 = vld [vmem:[%s6 + $0x30] sm:$0xff]
      %v553 = vld [vmem:[%s6 + $0x38] sm:$0xff]
      %v554 = vld [vmem:[%s6 + $0x40] sm:$0xff]
      %v555 = vld [vmem:[%s6 + $0x48] sm:$0xff]
      %v556 = vld [vmem:[%s6 + $0x50] sm:$0xff]
      %v557 = vld [vmem:[%s6 + $0x58] sm:$0xff]
      %v558 = vld [vmem:[%s6 + $0x60] sm:$0xff]
      %v559 = vld [vmem:[%s6 + $0x68] sm:$0xff]
      %v560 = vld [vmem:[%s6 + $0x70] sm:$0xff]
      %v561 = vld [vmem:[%s6 + $0x78] sm:$0xff]
      %562 = vmatprep.subr.mxu0 0.0
      %563 = vmatpush1.msra.mxu0 %v561
      %564 = vmatprep.subr.mxu0 0.0
      %565 = vmatpush1.msra.mxu0 %v560
      %566 = vmatprep.subr.mxu0 0.0
      %567 = vmatpush1.msra.mxu0 %v559
      %568 = vmatprep.subr.mxu0 0.0
      %569 = vmatpush1.msra.mxu0 %v558
      %570 = vmatprep.subr.mxu0 0.0
      %571 = vmatpush1.msra.mxu0 %v557
      %572 = vmatprep.subr.mxu0 0.0
      %573 = vmatpush1.msra.mxu0 %v556
      %574 = vmatprep.subr.mxu0 0.0
      %575 = vmatpush1.msra.mxu0 %v555
      %576 = vmatprep.subr.mxu0 0.0
      %577 = vmatpush1.msra.mxu0 %v554
      %578 = vmatprep.subr.mxu0 0.0
      %579 = vmatpush1.msra.mxu0 %v553
      %580 = vmatprep.subr.mxu0 0.0
      %581 = vmatpush1.msra.mxu0 %v552
      %582 = vmatprep.subr.mxu0 0.0
      %583 = vmatpush1.msra.mxu0 %v551
      %584 = vmatprep.subr.mxu0 0.0
      %585 = vmatpush1.msra.mxu0 %v550
      %586 = vmatprep.subr.mxu0 0.0
      %587 = vmatpush1.msra.mxu0 %v549
      %588 = vmatprep.subr.mxu0 0.0
      %589 = vmatpush1.msra.mxu0 %v548
      %590 = vmatprep.subr.mxu0 0.0
      %591 = vmatpush1.msra.mxu0 %v547
      %592 = vmatprep.subr.mxu0 0.0
      %593 = vmatpush1.msra.mxu0 %v546
      %594 = vmatprep.subr.mxu0 0.0
      %595 = vmatpush2.msra.mxu0 0.0
      %596 = vmatprep.subr.mxu0 0.0
      %597 = vmatpush2.msra.mxu0 0.0
      %598 = vmatprep.subr.mxu0 0.0
      %599 = vmatpush2.msra.mxu0 0.0
      %600 = vmatprep.subr.mxu0 0.0
      %601 = vmatpush2.msra.mxu0 0.0
      %602 = vmatprep.subr.mxu0 0.0
      %603 = vmatpush2.msra.mxu0 0.0
      %604 = vmatprep.subr.mxu0 0.0
      %605 = vmatpush2.msra.mxu0 0.0
      %606 = vmatprep.subr.mxu0 0.0
      %607 = vmatpush2.msra.mxu0 0.0
      %608 = vmatprep.subr.mxu0 0.0
      %609 = vmatpush2.msra.mxu0 0.0
      %610 = vmatprep.subr.mxu0 0.0
      %611 = vmatpush2.msra.mxu0 0.0
      %612 = vmatprep.subr.mxu0 0.0
      %613 = vmatpush2.msra.mxu0 0.0
      %614 = vmatprep.subr.mxu0 0.0
      %615 = vmatpush2.msra.mxu0 0.0
      %616 = vmatprep.subr.mxu0 0.0
      %617 = vmatpush2.msra.mxu0 0.0
      %618 = vmatprep.subr.mxu0 0.0
      %619 = vmatpush2.msra.mxu0 0.0
      %620 = vmatprep.subr.mxu0 0.0
      %621 = vmatpush2.msra.mxu0 0.0
      %622 = vmatprep.subr.mxu0 0.0
      %623 = vmatpush2.msra.mxu0 0.0
      %624 = vmatprep.subr.mxu0 0.0
      %625 = vmatpush2.msra.mxu0 0.0
      %626 = vmatprep.mubr.f32.mxu0 0.0
      %627 = vmatmul.mubr.f32.gmra.mxu0 %v545
      %v628 = vpop.f32.mrf.mxu0
      %v629 = vadd.f32 0.0, %v628
      %v630 = vpop.f32.mrf.mxu0
      %631 = vdwg.mxu0
      %s632 = sld [smem:[#allocation6 + %s26]]
      %p633 = scmp.ne.s32.totalorder %s632, 0
      %s634 = scalar_select %p633, 1, 0
      %s635 = scvt.s32.f32 %s634
      %v636 = vld [vmem:[%s303] sm:$0xff]
      %v637 = vstv %s635
      %v638 = vmul.f32 %v637, %v636
      %s639 = ssub.f32 1.0, %s635
      %v640 = vstv %s639
      %v641 = vmul.f32 %v640, %v629
      %v642 = vadd.f32 %v638, %v641
      %643 = vst [vmem:[#allocation4] sm:$0xff] %v642
      %p644 = scmp.lt.s32.totalorder %s26, 6
      %s645 = scalar_select %p644, %s26, 6
      %s646 = smul.addr %s645, 8
      %s647 = scalar_lea.vmem %s9, %s646
      // Predicated region
      $region57: #{seq2seq_forward.3} parent=51 // pred_check
        %p648 = pneg %p217
      $region58: #{seq2seq_forward.3} parent=51 // pred_check_branch
        %650 = sbr.rel (%p648) target = $region60
      $region59: #{seq2seq_forward.3} parent=51 // pred_region
        _
      $region60: #{seq2seq_forward.3} parent=51 // pred_fallthru
        _
    $region52: #{seq2seq_forward.3} parent=5 // pred_fallthru
      _
    %p651 = scmp.le.s32.totalorder 2, %s21
    // Predicated region
    $region61: #{seq2seq_forward.3} parent=5 // pred_check
      %p652 = pneg %p651
    $region62: #{seq2seq_forward.3} parent=5 // pred_check_branch
      %654 = sbr.rel (%p652) target = $region64
    $region63: #{seq2seq_forward.3} parent=5 // pred_region
      %s655 = ssub.s32 %s21, 2
      // Predicated region
      $region65: #{seq2seq_forward.3} parent=63 // pred_check
        %p656 = pneg %p223
      $region66: #{seq2seq_forward.3} parent=63 // pred_check_branch
        %658 = sbr.rel (%p656) target = $region68
      $region67: #{seq2seq_forward.3} parent=63 // pred_region
        %p659 = scmp.lt.s32.totalorder %s27, 6
        %s660 = scalar_select %p659, %s27, 6
        %s661 = smul.addr %s660, 8
        %s662 = scalar_lea.vmem %s9, %s661
      $region68: #{seq2seq_forward.3} parent=63 // pred_fallthru
        _
    $region64: #{seq2seq_forward.3} parent=5 // pred_fallthru
      _
  $region6: #{seq2seq_forward.3} parent=0 // loop_footer
    %s25 = sadd.s32 1, %s21
  $region7: #{seq2seq_forward.3} parent=0 // loop_footer_branch
    %20 = sbr.rel target = $region3
  $region8: #{seq2seq_forward.3} parent=0 // loop_exit
    _

</llo_original>
